<compile_context>
chip_gen: v7x
topology: tpu7x:2x2x1
jax: 0.10.0
libtpu: 0.0.40
codegen_flags: <defaults>
</compile_context>

<pallas_src>
import jax
import jax.numpy as jnp
from jax.experimental import pallas as pl
from jax.experimental.pallas import tpu as pltpu


# ---------------------------------------------------------------------------
# Kernel: Conv1d (k=9, stride=1, zero pad) for one batch element, lane = L_out
# ---------------------------------------------------------------------------
def _conv1d_kernel(x_ref, w_ref, b_ref, o_ref, xp_ref):
    # x_ref : (1, C_in, L)        one batch element
    # w_ref : (2, C_in, K)        conv weight (resident in VMEM)
    # b_ref : (2, 1)              conv bias
    # o_ref : (1, 2, L_out)       conv output for this batch element
    # xp_ref: (C_in, L + 2*pad)   VMEM scratch holding the zero-padded input
    C_in = x_ref.shape[1]
    L = x_ref.shape[2]
    K = w_ref.shape[2]
    L_out = o_ref.shape[2]
    pad = (xp_ref.shape[1] - L) // 2

    # In-kernel zero padding (no HBM round-trip for a padded copy of x).
    xp_ref[...] = jnp.zeros_like(xp_ref)
    xp_ref[:, pl.ds(pad, L)] = x_ref[0]

    w0 = w_ref[0]  # (C_in, K)
    w1 = w_ref[1]  # (C_in, K)

    acc0 = jnp.zeros((C_in, L_out), jnp.float32)
    acc1 = jnp.zeros((C_in, L_out), jnp.float32)
    # Static unroll over the 9 taps: shifted window (lane axis = L_out) times a
    # per-channel scalar column, accumulated on the VPU.
    for k in range(K):
        xs = xp_ref[:, pl.ds(k, L_out)]            # (C_in, L_out)
        acc0 = acc0 + w0[:, k:k + 1] * xs
        acc1 = acc1 + w1[:, k:k + 1] * xs

    y0 = jnp.sum(acc0, axis=0, keepdims=True)      # (1, L_out)  sublane reduce
    y1 = jnp.sum(acc1, axis=0, keepdims=True)      # (1, L_out)
    y = jnp.concatenate([y0, y1], axis=0) + b_ref[...]   # (2, L_out)
    o_ref[0] = y.astype(o_ref.dtype)


# ---------------------------------------------------------------------------
# Module wrapper (forward semantics of LastConv_AE)
# ---------------------------------------------------------------------------
class LastConvAE:
    KERNEL_SIZE = 9

    def __init__(self, in_ch, size, key, verbose=0):
        self.verbose = verbose
        self.in_ch = in_ch
        self.size = size
        self.pad = int((size - 1) / 2)
        K = self.KERNEL_SIZE
        kw, kb = jax.random.split(key)
        bound = 1.0 / (in_ch * K) ** 0.5  # PyTorch Conv1d default init range
        self.weight = jax.random.uniform(kw, (2, in_ch, K), jnp.float32, -bound, bound)
        self.bias = jax.random.uniform(kb, (2,), jnp.float32, -bound, bound)

    def __call__(self, x):
        # x: (N, C_in, L) float32
        N, C_in, L = x.shape
        K, pad = self.KERNEL_SIZE, self.pad
        L_out = L + 2 * pad - K + 1

        y = pl.pallas_call(
            _conv1d_kernel,
            out_shape=jax.ShapeDtypeStruct((N, 2, L_out), jnp.float32),
            grid_spec=pltpu.PrefetchScalarGridSpec(
                num_scalar_prefetch=0,
                grid=(N,),
                in_specs=[
                    pl.BlockSpec((1, C_in, L), lambda n: (n, 0, 0)),   # x
                    pl.BlockSpec((2, C_in, K), lambda n: (0, 0, 0)),   # weight (resident)
                    pl.BlockSpec((2, 1), lambda n: (0, 0)),            # bias (resident)
                ],
                out_specs=pl.BlockSpec((1, 2, L_out), lambda n: (n, 0, 0)),
                scratch_shapes=[pltpu.VMEM((C_in, L + 2 * pad), jnp.float32)],
            ),
            compiler_params=pltpu.CompilerParams(
                dimension_semantics=("parallel",),
            ),
        )(x, self.weight, self.bias.reshape(2, 1))

        # Subpixel: pixel_shuffle_1d(y, 2): out[n, 0, 2l + j] = y[n, j, l]
        return y.transpose(0, 2, 1).reshape(N, 1, 2 * L_out)


# ---------------------------------------------------------------------------
# Pure-JAX reference for verification
# ---------------------------------------------------------------------------
def _reference(mod, x):
    y = jax.lax.conv_general_dilated(
        x, mod.weight,
        window_strides=(1,),
        padding=[(mod.pad, mod.pad)],
        dimension_numbers=("NCH", "OIH", "NCH"),
    ) + mod.bias[None, :, None]
    N, _, L_out = y.shape
    return y.transpose(0, 2, 1).reshape(N, 1, 2 * L_out)


if __name__ == "__main__":
    key = jax.random.PRNGKey(0)
    k_param, k_x = jax.random.split(key)

    N, in_ch, L, size = 2, 4, 128, 9   # size=9 -> pad=4 -> L_out = L
    mod = LastConvAE(in_ch, size, k_param)
    x = jax.random.normal(k_x, (N, in_ch, L), jnp.float32)

    out = mod(x)
    jax.block_until_ready(out)

    out_ref = _reference(mod, x)
    L_out = L + 2 * mod.pad - LastConvAE.KERNEL_SIZE + 1
    assert out.shape == (N, 1, 2 * L_out), out.shape
    assert jnp.allclose(out, out_ref, atol=1e-5, rtol=1e-5)

    print("KERNEL_OK")
</pallas_src>

<mosaic_0001>
module attributes {stable_mosaic.version = 11 : i64} {
  func.func @_conv1d_kernel(%arg0: i32, %arg1: memref<1x4x128xf32, #tpu.memory_space<vmem>>, %arg2: memref<2x4x9xf32, #tpu.memory_space<vmem>>, %arg3: memref<2x1xf32, #tpu.memory_space<vmem>>, %arg4: memref<1x2x128xf32, #tpu.memory_space<vmem>>, %arg5: memref<4x136xf32, #tpu.memory_space<vmem>>) attributes {dimension_semantics = [#tpu.dimension_semantics<parallel>], iteration_bounds = array<i64: 2>, scalar_prefetch = 0 : i64, scratch_operands = 1 : i64, tpu.core_type = #tpu.core_type<tc>, window_params = [{transform_indices = @transform_0, window_bounds = array<i64: 1, 4, 128>}, {pipeline_mode = #tpu.pipeline_mode<synchronous>, transform_indices = @transform_1, window_bounds = array<i64: 2, 4, 9>}, {pipeline_mode = #tpu.pipeline_mode<synchronous>, transform_indices = @transform_2, window_bounds = array<i64: 2, 1>}, {transform_indices = @transform_3, window_bounds = array<i64: 1, 2, 128>}]} {
    %cst = arith.constant 0.000000e+00 : f32
    %0 = vector.broadcast %cst : f32 to vector<4x136xf32>
    %c0 = arith.constant 0 : index
    %c0_0 = arith.constant 0 : index
    %1 = vector.load %arg5[%c0, %c0_0] : memref<4x136xf32, #tpu.memory_space<vmem>>, vector<4x136xf32>
    tpu.vector_store %arg5[%c0, %c0_0], %0 {strides = array<i32>} : memref<4x136xf32, #tpu.memory_space<vmem>>, vector<4x136xf32>,
    %c0_1 = arith.constant 0 : index
    %c0_2 = arith.constant 0 : index
    %c0_3 = arith.constant 0 : index
    %2 = vector.load %arg1[%c0_1, %c0_2, %c0_3] : memref<1x4x128xf32, #tpu.memory_space<vmem>>, vector<1x4x128xf32>
    %3 = vector.shape_cast %2 : vector<1x4x128xf32> to vector<4x128xf32>
    %c0_4 = arith.constant 0 : index
    %c4 = arith.constant 4 : index
    %4 = vector.load %arg5[%c0_4, %c4] : memref<4x136xf32, #tpu.memory_space<vmem>>, vector<4x128xf32>
    tpu.vector_store %arg5[%c0_4, %c4], %3 {strides = array<i32>} : memref<4x136xf32, #tpu.memory_space<vmem>>, vector<4x128xf32>,
    %c0_5 = arith.constant 0 : index
    %c0_6 = arith.constant 0 : index
    %c0_7 = arith.constant 0 : index
    %5 = vector.load %arg2[%c0_5, %c0_6, %c0_7] : memref<2x4x9xf32, #tpu.memory_space<vmem>>, vector<1x4x9xf32>
    %6 = vector.shape_cast %5 : vector<1x4x9xf32> to vector<4x9xf32>
    %c1 = arith.constant 1 : index
    %c0_8 = arith.constant 0 : index
    %c0_9 = arith.constant 0 : index
    %7 = vector.load %arg2[%c1, %c0_8, %c0_9] : memref<2x4x9xf32, #tpu.memory_space<vmem>>, vector<1x4x9xf32>
    %8 = vector.shape_cast %7 : vector<1x4x9xf32> to vector<4x9xf32>
    %cst_10 = arith.constant 0.000000e+00 : f32
    %9 = vector.broadcast %cst_10 : f32 to vector<4x128xf32>
    %cst_11 = arith.constant 0.000000e+00 : f32
    %10 = vector.broadcast %cst_11 : f32 to vector<4x128xf32>
    %c0_12 = arith.constant 0 : index
    %c0_13 = arith.constant 0 : index
    %11 = vector.load %arg5[%c0_12, %c0_13] : memref<4x136xf32, #tpu.memory_space<vmem>>, vector<4x128xf32>
    %12 = vector.extract_strided_slice %6 {offsets = [0, 0], sizes = [4, 1], strides = [1, 1]} : vector<4x9xf32> to vector<4x1xf32>
    %13 = vector.broadcast %12 : vector<4x1xf32> to vector<4x128xf32>
    %14 = arith.mulf %13, %11 : vector<4x128xf32>
    %15 = arith.addf %9, %14 : vector<4x128xf32>
    %16 = vector.extract_strided_slice %8 {offsets = [0, 0], sizes = [4, 1], strides = [1, 1]} : vector<4x9xf32> to vector<4x1xf32>
    %17 = vector.broadcast %16 : vector<4x1xf32> to vector<4x128xf32>
    %18 = arith.mulf %17, %11 : vector<4x128xf32>
    %19 = arith.addf %10, %18 : vector<4x128xf32>
    %c0_14 = arith.constant 0 : index
    %c1_15 = arith.constant 1 : index
    %20 = vector.load %arg5[%c0_14, %c1_15] : memref<4x136xf32, #tpu.memory_space<vmem>>, vector<4x128xf32>
    %21 = vector.extract_strided_slice %6 {offsets = [0, 1], sizes = [4, 1], strides = [1, 1]} : vector<4x9xf32> to vector<4x1xf32>
    %22 = vector.broadcast %21 : vector<4x1xf32> to vector<4x128xf32>
    %23 = arith.mulf %22, %20 : vector<4x128xf32>
    %24 = arith.addf %15, %23 : vector<4x128xf32>
    %25 = vector.extract_strided_slice %8 {offsets = [0, 1], sizes = [4, 1], strides = [1, 1]} : vector<4x9xf32> to vector<4x1xf32>
    %26 = vector.broadcast %25 : vector<4x1xf32> to vector<4x128xf32>
    %27 = arith.mulf %26, %20 : vector<4x128xf32>
    %28 = arith.addf %19, %27 : vector<4x128xf32>
    %c0_16 = arith.constant 0 : index
    %c2 = arith.constant 2 : index
    %29 = vector.load %arg5[%c0_16, %c2] : memref<4x136xf32, #tpu.memory_space<vmem>>, vector<4x128xf32>
    %30 = vector.extract_strided_slice %6 {offsets = [0, 2], sizes = [4, 1], strides = [1, 1]} : vector<4x9xf32> to vector<4x1xf32>
    %31 = vector.broadcast %30 : vector<4x1xf32> to vector<4x128xf32>
    %32 = arith.mulf %31, %29 : vector<4x128xf32>
    %33 = arith.addf %24, %32 : vector<4x128xf32>
    %34 = vector.extract_strided_slice %8 {offsets = [0, 2], sizes = [4, 1], strides = [1, 1]} : vector<4x9xf32> to vector<4x1xf32>
    %35 = vector.broadcast %34 : vector<4x1xf32> to vector<4x128xf32>
    %36 = arith.mulf %35, %29 : vector<4x128xf32>
    %37 = arith.addf %28, %36 : vector<4x128xf32>
    %c0_17 = arith.constant 0 : index
    %c3 = arith.constant 3 : index
    %38 = vector.load %arg5[%c0_17, %c3] : memref<4x136xf32, #tpu.memory_space<vmem>>, vector<4x128xf32>
    %39 = vector.extract_strided_slice %6 {offsets = [0, 3], sizes = [4, 1], strides = [1, 1]} : vector<4x9xf32> to vector<4x1xf32>
    %40 = vector.broadcast %39 : vector<4x1xf32> to vector<4x128xf32>
    %41 = arith.mulf %40, %38 : vector<4x128xf32>
    %42 = arith.addf %33, %41 : vector<4x128xf32>
    %43 = vector.extract_strided_slice %8 {offsets = [0, 3], sizes = [4, 1], strides = [1, 1]} : vector<4x9xf32> to vector<4x1xf32>
    %44 = vector.broadcast %43 : vector<4x1xf32> to vector<4x128xf32>
    %45 = arith.mulf %44, %38 : vector<4x128xf32>
    %46 = arith.addf %37, %45 : vector<4x128xf32>
    %c0_18 = arith.constant 0 : index
    %c4_19 = arith.constant 4 : index
    %47 = vector.load %arg5[%c0_18, %c4_19] : memref<4x136xf32, #tpu.memory_space<vmem>>, vector<4x128xf32>
    %48 = vector.extract_strided_slice %6 {offsets = [0, 4], sizes = [4, 1], strides = [1, 1]} : vector<4x9xf32> to vector<4x1xf32>
    %49 = vector.broadcast %48 : vector<4x1xf32> to vector<4x128xf32>
    %50 = arith.mulf %49, %47 : vector<4x128xf32>
    %51 = arith.addf %42, %50 : vector<4x128xf32>
    %52 = vector.extract_strided_slice %8 {offsets = [0, 4], sizes = [4, 1], strides = [1, 1]} : vector<4x9xf32> to vector<4x1xf32>
    %53 = vector.broadcast %52 : vector<4x1xf32> to vector<4x128xf32>
    %54 = arith.mulf %53, %47 : vector<4x128xf32>
    %55 = arith.addf %46, %54 : vector<4x128xf32>
    %c0_20 = arith.constant 0 : index
    %c5 = arith.constant 5 : index
    %56 = vector.load %arg5[%c0_20, %c5] : memref<4x136xf32, #tpu.memory_space<vmem>>, vector<4x128xf32>
    %57 = vector.extract_strided_slice %6 {offsets = [0, 5], sizes = [4, 1], strides = [1, 1]} : vector<4x9xf32> to vector<4x1xf32>
    %58 = vector.broadcast %57 : vector<4x1xf32> to vector<4x128xf32>
    %59 = arith.mulf %58, %56 : vector<4x128xf32>
    %60 = arith.addf %51, %59 : vector<4x128xf32>
    %61 = vector.extract_strided_slice %8 {offsets = [0, 5], sizes = [4, 1], strides = [1, 1]} : vector<4x9xf32> to vector<4x1xf32>
    %62 = vector.broadcast %61 : vector<4x1xf32> to vector<4x128xf32>
    %63 = arith.mulf %62, %56 : vector<4x128xf32>
    %64 = arith.addf %55, %63 : vector<4x128xf32>
    %c0_21 = arith.constant 0 : index
    %c6 = arith.constant 6 : index
    %65 = vector.load %arg5[%c0_21, %c6] : memref<4x136xf32, #tpu.memory_space<vmem>>, vector<4x128xf32>
    %66 = vector.extract_strided_slice %6 {offsets = [0, 6], sizes = [4, 1], strides = [1, 1]} : vector<4x9xf32> to vector<4x1xf32>
    %67 = vector.broadcast %66 : vector<4x1xf32> to vector<4x128xf32>
    %68 = arith.mulf %67, %65 : vector<4x128xf32>
    %69 = arith.addf %60, %68 : vector<4x128xf32>
    %70 = vector.extract_strided_slice %8 {offsets = [0, 6], sizes = [4, 1], strides = [1, 1]} : vector<4x9xf32> to vector<4x1xf32>
    %71 = vector.broadcast %70 : vector<4x1xf32> to vector<4x128xf32>
    %72 = arith.mulf %71, %65 : vector<4x128xf32>
    %73 = arith.addf %64, %72 : vector<4x128xf32>
    %c0_22 = arith.constant 0 : index
    %c7 = arith.constant 7 : index
    %74 = vector.load %arg5[%c0_22, %c7] : memref<4x136xf32, #tpu.memory_space<vmem>>, vector<4x128xf32>
    %75 = vector.extract_strided_slice %6 {offsets = [0, 7], sizes = [4, 1], strides = [1, 1]} : vector<4x9xf32> to vector<4x1xf32>
    %76 = vector.broadcast %75 : vector<4x1xf32> to vector<4x128xf32>
    %77 = arith.mulf %76, %74 : vector<4x128xf32>
    %78 = arith.addf %69, %77 : vector<4x128xf32>
    %79 = vector.extract_strided_slice %8 {offsets = [0, 7], sizes = [4, 1], strides = [1, 1]} : vector<4x9xf32> to vector<4x1xf32>
    %80 = vector.broadcast %79 : vector<4x1xf32> to vector<4x128xf32>
    %81 = arith.mulf %80, %74 : vector<4x128xf32>
    %82 = arith.addf %73, %81 : vector<4x128xf32>
    %c0_23 = arith.constant 0 : index
    %c8 = arith.constant 8 : index
    %83 = vector.load %arg5[%c0_23, %c8] : memref<4x136xf32, #tpu.memory_space<vmem>>, vector<4x128xf32>
    %84 = vector.extract_strided_slice %6 {offsets = [0, 8], sizes = [4, 1], strides = [1, 1]} : vector<4x9xf32> to vector<4x1xf32>
    %85 = vector.broadcast %84 : vector<4x1xf32> to vector<4x128xf32>
    %86 = arith.mulf %85, %83 : vector<4x128xf32>
    %87 = arith.addf %78, %86 : vector<4x128xf32>
    %88 = vector.extract_strided_slice %8 {offsets = [0, 8], sizes = [4, 1], strides = [1, 1]} : vector<4x9xf32> to vector<4x1xf32>
    %89 = vector.broadcast %88 : vector<4x1xf32> to vector<4x128xf32>
    %90 = arith.mulf %89, %83 : vector<4x128xf32>
    %91 = arith.addf %82, %90 : vector<4x128xf32>
    %cst_24 = arith.constant dense<0.000000e+00> : vector<128xf32>
    %92 = vector.multi_reduction <add>, %87, %cst_24 [0] : vector<4x128xf32> to vector<128xf32>
    %93 = vector.shape_cast %92 : vector<128xf32> to vector<1x128xf32>
    %cst_25 = arith.constant dense<0.000000e+00> : vector<128xf32>
    %94 = vector.multi_reduction <add>, %91, %cst_25 [0] : vector<4x128xf32> to vector<128xf32>
    %95 = vector.shape_cast %94 : vector<128xf32> to vector<1x128xf32>
    %96 = tpu.concatenate %93, %95 in 0 : vector<1x128xf32>, vector<1x128xf32> -> vector<2x128xf32>
    %c0_26 = arith.constant 0 : index
    %c0_27 = arith.constant 0 : index
    %97 = vector.load %arg3[%c0_26, %c0_27] : memref<2x1xf32, #tpu.memory_space<vmem>>, vector<2x1xf32>
    %98 = vector.broadcast %97 : vector<2x1xf32> to vector<2x128xf32>
    %99 = arith.addf %96, %98 : vector<2x128xf32>
    %c0_28 = arith.constant 0 : index
    %c0_29 = arith.constant 0 : index
    %c0_30 = arith.constant 0 : index
    %100 = vector.load %arg4[%c0_28, %c0_29, %c0_30] : memref<1x2x128xf32, #tpu.memory_space<vmem>>, vector<1x2x128xf32>
    %101 = vector.shape_cast %100 : vector<1x2x128xf32> to vector<2x128xf32>
    %102 = vector.shape_cast %99 : vector<2x128xf32> to vector<1x2x128xf32>
    tpu.vector_store %arg4[%c0_28, %c0_29, %c0_30], %102 {strides = array<i32>} : memref<1x2x128xf32, #tpu.memory_space<vmem>>, vector<1x2x128xf32>,
    return
  }
  func.func @transform_0(%arg0: i32) -> (i32, i32, i32) {
    %c0_i32 = arith.constant 0 : i32
    %c0_i32_0 = arith.constant 0 : i32
    %c0_i32_1 = arith.constant 0 : i32
    return %arg0, %c0_i32, %c0_i32_0 : i32, i32, i32
  }
  func.func @transform_1(%arg0: i32) -> (i32, i32, i32) {
    %c0_i32 = arith.constant 0 : i32
    %c0_i32_0 = arith.constant 0 : i32
    %c0_i32_1 = arith.constant 0 : i32
    %c0_i32_2 = arith.constant 0 : i32
    return %c0_i32, %c0_i32_0, %c0_i32_1 : i32, i32, i32
  }
  func.func @transform_2(%arg0: i32) -> (i32, i32) {
    %c0_i32 = arith.constant 0 : i32
    %c0_i32_0 = arith.constant 0 : i32
    %c0_i32_1 = arith.constant 0 : i32
    return %c0_i32, %c0_i32_0 : i32, i32
  }
  func.func @transform_3(%arg0: i32) -> (i32, i32, i32) {
    %c0_i32 = arith.constant 0 : i32
    %c0_i32_0 = arith.constant 0 : i32
    %c0_i32_1 = arith.constant 0 : i32
    return %arg0, %c0_i32, %c0_i32_0 : i32, i32, i32
  }
}

</mosaic_0001>

<llo_original>
// kernel: tpu_custom_call.1
$region0: #{tpu_custom_call.1}
  #allocation0 [shape = 'u32[]', space=smem, size = 0x4, offset = 0x4, fixed_abs, tag = 'smem constant byte address 0x4 - core index']
  #allocation1 [shape = 'u32[144,128]{1,0:T(1,128)}', space=vmem, size = 0x12000, scoped, tag = 'internal scratch']
  #allocation2 [shape = 'f32[4,136]{1,0:T(4,128)}', space=vmem, size = 0x1000, scoped, tag = 'scratch operand']
  %s0 = inlined_call_operand.hbm [shape: f32[2,4,128], index: 0, kind: input, shape index: {}]
  %s1 = inlined_call_operand.hbm [shape: f32[2,4,9], index: 1, kind: input, shape index: {}]
  %s2 = inlined_call_operand.vmem [shape: f32[2,1], index: 2, kind: input, shape index: {}]
  %s3 = inlined_call_operand.hbm [shape: f32[2,2,128], index: 3, kind: output, shape index: {}]
  %s4 = sld [smem:[#allocation0]]
  $region53: #{tpu_custom_call.1} parent=0
    _
  %s6 = ssub.s32 1, %s4
  %s7 = scalar_select 0, %s6, %s4
  $region1: #{tpu_custom_call.1} parent=0
    #allocation3 [shape = 'u8[4096]{0}', space=vmem, size = 0x1000, scoped, tag = 'input window, operand 0']
    #allocation4 [shape = 's32[2]{0}', space=sflag, size = 0x8, scoped, tag = 'scoped memory for tpu_custom_call.1']
    #allocation5 [shape = 's32[2]{0}', space=sflag, size = 0x8, scoped, tag = 'scoped memory for tpu_custom_call.1']
    #allocation6 [shape = 'u8[4096]{0}', space=vmem, size = 0x1000, scoped, tag = 'input window, operand 1, single buffered']
    #allocation7 [shape = 's32[1]{0}', space=sflag, size = 0x4, scoped, tag = 'scoped memory for tpu_custom_call.1']
    #allocation8 [shape = 'u8[2048]{0}', space=vmem, size = 0x800, scoped, tag = 'output window, operand 0']
    %8 = vsyncpa [#allocation4], 0
    %s9 = scalar_lea.sflag [#allocation4], 1
    %10 = vsyncpa %s9, 0
    %11 = vsyncpa [#allocation7], 0
    %12 = vsyncpa [#allocation5], 0
    %s13 = scalar_lea.sflag [#allocation5], 1
    %14 = vsyncpa %s13, 0
    loop: start=0, step=1, limit=4
    $region2: #{tpu_custom_call.1} parent=1 // loop_pre_header
      _
    $region3: #{tpu_custom_call.1} parent=1 // loop_header
      %s16 = sphi 0, %s20
      %p17 = scmp.ge.s32.totalorder %s16, 4
      %s26 = sphi 0, %s28
      %s29 = sphi 0, %s26
      %s30 = sphi 0, %s29
      %s46 = sphi 0, %s30
      %s50 = sphi 0, %s50
      %s52 = sphi 0, %s50
      %s53 = sphi 0, %s52
      %s67 = sphi 0, %s53
      %s71 = sphi 0, %s71
      %s73 = sphi 0, %s71
      %s74 = sphi 0, %s73
      %s88 = sphi 0, %s74
      %s94 = sphi 0, %s96
      %s97 = sphi 0, %s94
      %s98 = sphi 0, %s97
      %s114 = sphi 0, %s98
    $region4: #{tpu_custom_call.1} parent=1 // loop_header_branch
      %19 = sbr.rel (%p17) target = $region8
    $region5: #{tpu_custom_call.1} parent=1 // loop_body
      %s21 = ssub.s32 %s16, 1
      %s22 = ssub.s32 %s16, 2
      %s23 = sadd.s32 %s16, 1
      %s24 = ssub.s32 %s16, %s23
      %p25 = scmp.eq.s32.totalorder %s24, 0
      %s27 = sadd.s32 %s26, 1
      %s28 = scalar_select %p25, %s26, %s27
      %p31 = pneg %p25
      %p32 = scmp.eq.s32.totalorder %s16, 1
      %p33 = por %p31, %p32
      %p34 = scmp.ne.s32.totalorder %s26, %s29
      %p35 = scmp.eq.s32.totalorder %s16, 0
      %p36 = por %p34, %p35
      %p37 = scmp.ne.s32.totalorder %s26, %s29
      %p38 = scmp.eq.s32.totalorder %s21, 1
      %p39 = por %p37, %p38
      %p40 = scmp.ne.s32.totalorder %s29, %s30
      %p41 = scmp.eq.s32.totalorder %s21, 0
      %p42 = por %p40, %p41
      %p43 = scmp.ne.s32.totalorder %s29, %s30
      %p44 = scmp.eq.s32.totalorder %s22, 1
      %p45 = por %p43, %p44
      %p47 = scmp.ne.s32.totalorder %s30, %s46
      %p48 = scmp.eq.s32.totalorder %s22, 0
      %p49 = por %p47, %p48
      %s51 = sadd.s32 %s50, 1
      %p54 = scmp.eq.s32.totalorder %s16, 1
      %p55 = scmp.ne.s32.totalorder %s50, %s52
      %p56 = scmp.eq.s32.totalorder %s16, 0
      %p57 = por %p55, %p56
      %p58 = scmp.ne.s32.totalorder %s50, %s52
      %p59 = scmp.eq.s32.totalorder %s21, 1
      %p60 = por %p58, %p59
      %p61 = scmp.ne.s32.totalorder %s52, %s53
      %p62 = scmp.eq.s32.totalorder %s21, 0
      %p63 = por %p61, %p62
      %p64 = scmp.ne.s32.totalorder %s52, %s53
      %p65 = scmp.eq.s32.totalorder %s22, 1
      %p66 = por %p64, %p65
      %p68 = scmp.ne.s32.totalorder %s53, %s67
      %p69 = scmp.eq.s32.totalorder %s22, 0
      %p70 = por %p68, %p69
      %s72 = sadd.s32 %s71, 1
      %p75 = scmp.eq.s32.totalorder %s16, 1
      %p76 = scmp.ne.s32.totalorder %s71, %s73
      %p77 = scmp.eq.s32.totalorder %s16, 0
      %p78 = por %p76, %p77
      %p79 = scmp.ne.s32.totalorder %s71, %s73
      %p80 = scmp.eq.s32.totalorder %s21, 1
      %p81 = por %p79, %p80
      %p82 = scmp.ne.s32.totalorder %s73, %s74
      %p83 = scmp.eq.s32.totalorder %s21, 0
      %p84 = por %p82, %p83
      %p85 = scmp.ne.s32.totalorder %s73, %s74
      %p86 = scmp.eq.s32.totalorder %s22, 1
      %p87 = por %p85, %p86
      %p89 = scmp.ne.s32.totalorder %s74, %s88
      %p90 = scmp.eq.s32.totalorder %s22, 0
      %p91 = por %p89, %p90
      %s92 = ssub.s32 %s16, %s23
      %p93 = scmp.eq.s32.totalorder %s92, 0
      %s95 = sadd.s32 %s94, 1
      %s96 = scalar_select %p93, %s94, %s95
      %p99 = pneg %p93
      %p100 = scmp.eq.s32.totalorder %s16, 1
      %p101 = por %p99, %p100
      %p102 = scmp.ne.s32.totalorder %s94, %s97
      %p103 = scmp.eq.s32.totalorder %s16, 0
      %p104 = por %p102, %p103
      %p105 = scmp.ne.s32.totalorder %s94, %s97
      %p106 = scmp.eq.s32.totalorder %s21, 1
      %p107 = por %p105, %p106
      %p108 = scmp.ne.s32.totalorder %s97, %s98
      %p109 = scmp.eq.s32.totalorder %s21, 0
      %p110 = por %p108, %p109
      %p111 = scmp.ne.s32.totalorder %s97, %s98
      %p112 = scmp.eq.s32.totalorder %s22, 1
      %p113 = por %p111, %p112
      %p115 = scmp.ne.s32.totalorder %s98, %s114
      %p116 = scmp.eq.s32.totalorder %s22, 0
      %p117 = por %p115, %p116
      %p118 = scmp.le.s32.totalorder 1, %s16
      %p119 = scmp.lt.s32.totalorder %s16, 3
      %p120 = pnand %p118, %p119
      %p121 = pneg %p120
      // Predicated region
      $region9: #{tpu_custom_call.1} parent=5 // pred_check
        _
      $region10: #{tpu_custom_call.1} parent=5 // pred_check_branch
        %123 = sbr.rel (%p120) target = $region12
      $region11: #{tpu_custom_call.1} parent=5 // pred_region
        %s124 = ssub.s32 %s16, 1
        // Predicated region
        $region13: #{tpu_custom_call.1} parent=11 // pred_check
          %p125 = pneg %p63
        $region14: #{tpu_custom_call.1} parent=11 // pred_check_branch
          %127 = sbr.rel (%p125) target = $region16
        $region15: #{tpu_custom_call.1} parent=11 // pred_region
          %s129 = ssub.s32 128, 128
          %130 = vsyncadd [#allocation7], %s129
          %s131 = sshll.u32 [#allocation6], 4
          %s132 = int_to_ptr.vmem [resolvable:$true] %s131
          %137 = dma.hbm_to_vmem [thread:$0]  %s1, 128, %s132, [#allocation7], 64, 64, 4
        $region16: #{tpu_custom_call.1} parent=11 // pred_fallthru
          _
        // Predicated region
        $region17: #{tpu_custom_call.1} parent=11 // pred_check
          %p138 = pneg %p84
        $region18: #{tpu_custom_call.1} parent=11 // pred_check_branch
          %140 = sbr.rel (%p138) target = $region20
        $region19: #{tpu_custom_call.1} parent=11 // pred_region
          _
        $region20: #{tpu_custom_call.1} parent=11 // pred_fallthru
          _
      $region12: #{tpu_custom_call.1} parent=5 // pred_fallthru
        _
      %p141 = scmp.lt.s32.totalorder %s16, 2
      // Predicated region
      $region21: #{tpu_custom_call.1} parent=5 // pred_check
        %p142 = pneg %p141
      $region22: #{tpu_custom_call.1} parent=5 // pred_check_branch
        %144 = sbr.rel (%p142) target = $region24
      $region23: #{tpu_custom_call.1} parent=5 // pred_region
        // Predicated region
        $region25: #{tpu_custom_call.1} parent=23 // pred_check
          %p145 = pneg %p36
        $region26: #{tpu_custom_call.1} parent=23 // pred_check_branch
          %147 = sbr.rel (%p145) target = $region28
        $region27: #{tpu_custom_call.1} parent=23 // pred_region
          %s148 = sand.u32 %s26, 1
          %s149 = scalar_lea.sflag [#allocation4], %s148
          %s150 = sand.u32 %s26, 1
          %s151 = smul.addr %s150, 4
          %s152 = scalar_lea.vmem [#allocation3], %s151
          %s154 = ssub.s32 64, 64
          %155 = vsyncadd %s149, %s154
          %s156 = smul.addr %s16, 64
          %s157 = scalar_lea.hbm %s0, %s156
          %s159 = sshll.u32 %s152, 4
          %s160 = int_to_ptr.vmem [resolvable:$true] %s159
          %162 = dma.hbm_to_vmem [thread:$0]  %s157, 64, %s160, %s149
        $region28: #{tpu_custom_call.1} parent=23 // pred_fallthru
          _
      $region24: #{tpu_custom_call.1} parent=5 // pred_fallthru
        _
      %p163 = scmp.le.s32.totalorder 1, %s16
      %p164 = scmp.lt.s32.totalorder %s16, 3
      %p165 = pnand %p163, %p164
      %p166 = pneg %p165
      // Predicated region
      $region29: #{tpu_custom_call.1} parent=5 // pred_check
        _
      $region30: #{tpu_custom_call.1} parent=5 // pred_check_branch
        %168 = sbr.rel (%p165) target = $region32
      $region31: #{tpu_custom_call.1} parent=5 // pred_region
        %s169 = ssub.s32 %s16, 1
        %s170 = sand.u32 %s29, 1
        %s171 = scalar_lea.sflag [#allocation4], %s170
        %s172 = sand.u32 %s29, 1
        %s173 = smul.addr %s172, 4
        %s174 = scalar_lea.vmem [#allocation3], %s173
        // Predicated region
        $region33: #{tpu_custom_call.1} parent=31 // pred_check
          %p175 = pneg %p42
        $region34: #{tpu_custom_call.1} parent=31 // pred_check_branch
          %177 = sbr.rel (%p175) target = $region36
        $region35: #{tpu_custom_call.1} parent=31 // pred_region
          %178 = dma.done %s171, 64
        $region36: #{tpu_custom_call.1} parent=31 // pred_fallthru
          _
        // Predicated region
        $region37: #{tpu_custom_call.1} parent=31 // pred_check
          %p179 = pneg %p63
        $region38: #{tpu_custom_call.1} parent=31 // pred_check_branch
          %181 = sbr.rel (%p179) target = $region40
        $region39: #{tpu_custom_call.1} parent=31 // pred_region
          %182 = dma.done [#allocation7], 128
        $region40: #{tpu_custom_call.1} parent=31 // pred_fallthru
          _
        %s183 = sand.u32 %s29, 1
        %s184 = scalar_lea.sflag [#allocation4], %s183
        %s185 = sand.u32 %s29, 1
        %s186 = smul.addr %s185, 4
        %s187 = scalar_lea.vmem [#allocation3], %s186
        %p188 = pneg %p42
        %p189 = pneg %p39
        %p190 = pneg %p63
        %p191 = pneg %p60
        %p192 = pneg %p84
        %p193 = pneg %p81
        %p194 = pneg %p110
        %p195 = pneg %p107
        %s196 = sand.u32 %s97, 1
        %s197 = scalar_lea.sflag [#allocation5], %s196
        %s198 = sand.u32 %s97, 1
        %s199 = smul.addr %s198, 2
        %s200 = scalar_lea.vmem [#allocation8], %s199
        %vm201 = vcmask 1043456
        %vm202 = vcmask 64516
        %vm203 = vmor %vm202, %vm201
        %204 = vst.msk [vmem:[#allocation2] sm:$0xff] %vm203, 0.0
        %v205 = vld [vmem:[%s174] sm:$0xf]
        %207 = vrot.lane.b32.xlu0 %v205, 4
        %v208 = vpop.permute.xlu0 %207
        %v209 = vrot.slane %v208, 4
        %vm210 = vcmask 31744
        %v211 = vsel %vm210, %v209, %v208
        %vm213 = vcmask 1043488
        %vm214 = vcmask 31748
        %vm215 = vmor %vm214, %vm213
        %216 = vst.msk [vmem:[#allocation2] sm:$0xff] %vm215, %v211
        %v217 = vld [vmem:[#allocation6] sm:$0xf]
        %s218 = scalar_lea.vmem [#allocation6], 4
        %v219 = vld [vmem:[%s218] sm:$0xf]
        %v220 = vld [vmem:[#allocation2] sm:$0xf]
        %222 = vset.pattern.permute.xlu0 0
        %223 = vperm.xlu0 %222, %v217
        %v224 = vpop.permute.xlu0 %223
        %v226 = vmul.f32 %v224, %v220
        %v227 = vadd.f32 %v226, 0.0
        %229 = vset.pattern.permute.xlu0 0
        %230 = vperm.xlu0 %229, %v219
        %v231 = vpop.permute.xlu0 %230
        %v233 = vmul.f32 %v231, %v220
        %v234 = vadd.f32 %v233, 0.0
        %v235 = vld [vmem:[#allocation2] sm:$0xff]
        %236 = vset.pattern.permute.xlu0 1
        %237 = vperm.xlu0 %236, %v217
        %v238 = vpop.permute.xlu0 %237
        %v241 = vcombine.high %v235, %v235
        %242 = vrot.lane.b32.xlu0 %v235, 127
        %v243 = vpop.permute.xlu0 %242
        %244 = vrot.lane.b32.xlu0 %v241, 127
        %v245 = vpop.permute.xlu0 %244
        %vm246 = vcmask 1039360
        %v247 = vsel %vm246, %v243, %v245
        %v249 = vmul.f32 %v238, %v247
        %v250 = vadd.f32 %v227, %v249
        %251 = vset.pattern.permute.xlu0 1
        %252 = vperm.xlu0 %251, %v219
        %v253 = vpop.permute.xlu0 %252
        %v255 = vmul.f32 %v253, %v247
        %v256 = vadd.f32 %v234, %v255
        %v257 = vld [vmem:[#allocation2] sm:$0xff]
        %258 = vset.pattern.permute.xlu0 2
        %259 = vperm.xlu0 %258, %v217
        %v260 = vpop.permute.xlu0 %259
        %v263 = vcombine.high %v257, %v257
        %264 = vrot.lane.b32.xlu0 %v257, 126
        %v265 = vpop.permute.xlu0 %264
        %266 = vrot.lane.b32.xlu0 %v263, 126
        %v267 = vpop.permute.xlu0 %266
        %vm268 = vcmask 1031168
        %v269 = vsel %vm268, %v265, %v267
        %v271 = vmul.f32 %v260, %v269
        %v272 = vadd.f32 %v250, %v271
        %273 = vset.pattern.permute.xlu0 2
        %274 = vperm.xlu0 %273, %v219
        %v275 = vpop.permute.xlu0 %274
        %v277 = vmul.f32 %v275, %v269
        %v278 = vadd.f32 %v256, %v277
        %v279 = vld [vmem:[#allocation2] sm:$0xff]
        %280 = vset.pattern.permute.xlu0 3
        %281 = vperm.xlu0 %280, %v217
        %v282 = vpop.permute.xlu0 %281
        %v285 = vcombine.high %v279, %v279
        %286 = vrot.lane.b32.xlu0 %v279, 125
        %v287 = vpop.permute.xlu0 %286
        %288 = vrot.lane.b32.xlu0 %v285, 125
        %v289 = vpop.permute.xlu0 %288
        %vm290 = vcmask 1022976
        %v291 = vsel %vm290, %v287, %v289
        %v293 = vmul.f32 %v282, %v291
        %v294 = vadd.f32 %v272, %v293
        %295 = vset.pattern.permute.xlu0 3
        %296 = vperm.xlu0 %295, %v219
        %v297 = vpop.permute.xlu0 %296
        %v299 = vmul.f32 %v297, %v291
        %v300 = vadd.f32 %v278, %v299
        %v301 = vld [vmem:[#allocation2] sm:$0xff]
        %302 = vset.pattern.permute.xlu0 4
        %303 = vperm.xlu0 %302, %v217
        %v304 = vpop.permute.xlu0 %303
        %v307 = vcombine.high %v301, %v301
        %308 = vrot.lane.b32.xlu0 %v301, 124
        %v309 = vpop.permute.xlu0 %308
        %310 = vrot.lane.b32.xlu0 %v307, 124
        %v311 = vpop.permute.xlu0 %310
        %vm312 = vcmask 1014784
        %v313 = vsel %vm312, %v309, %v311
        %v315 = vmul.f32 %v304, %v313
        %v316 = vadd.f32 %v294, %v315
        %317 = vset.pattern.permute.xlu0 4
        %318 = vperm.xlu0 %317, %v219
        %v319 = vpop.permute.xlu0 %318
        %v321 = vmul.f32 %v319, %v313
        %v322 = vadd.f32 %v300, %v321
        %v323 = vld [vmem:[#allocation2] sm:$0xff]
        %324 = vset.pattern.permute.xlu0 5
        %325 = vperm.xlu0 %324, %v217
        %v326 = vpop.permute.xlu0 %325
        %v329 = vcombine.high %v323, %v323
        %330 = vrot.lane.b32.xlu0 %v323, 123
        %v331 = vpop.permute.xlu0 %330
        %332 = vrot.lane.b32.xlu0 %v329, 123
        %v333 = vpop.permute.xlu0 %332
        %vm334 = vcmask 1006592
        %v335 = vsel %vm334, %v331, %v333
        %v337 = vmul.f32 %v326, %v335
        %v338 = vadd.f32 %v316, %v337
        %339 = vset.pattern.permute.xlu0 5
        %340 = vperm.xlu0 %339, %v219
        %v341 = vpop.permute.xlu0 %340
        %v343 = vmul.f32 %v341, %v335
        %v344 = vadd.f32 %v322, %v343
        %v345 = vld [vmem:[#allocation2] sm:$0xff]
        %346 = vset.pattern.permute.xlu0 6
        %347 = vperm.xlu0 %346, %v217
        %v348 = vpop.permute.xlu0 %347
        %v351 = vcombine.high %v345, %v345
        %352 = vrot.lane.b32.xlu0 %v345, 122
        %v353 = vpop.permute.xlu0 %352
        %354 = vrot.lane.b32.xlu0 %v351, 122
        %v355 = vpop.permute.xlu0 %354
        %vm356 = vcmask 998400
        %v357 = vsel %vm356, %v353, %v355
        %v359 = vmul.f32 %v348, %v357
        %v360 = vadd.f32 %v338, %v359
        %361 = vset.pattern.permute.xlu0 6
        %362 = vperm.xlu0 %361, %v219
        %v363 = vpop.permute.xlu0 %362
        %v365 = vmul.f32 %v363, %v357
        %v366 = vadd.f32 %v344, %v365
        %v367 = vld [vmem:[#allocation2] sm:$0xff]
        %368 = vset.pattern.permute.xlu0 7
        %369 = vperm.xlu0 %368, %v217
        %v370 = vpop.permute.xlu0 %369
        %v373 = vcombine.high %v367, %v367
        %374 = vrot.lane.b32.xlu0 %v367, 121
        %v375 = vpop.permute.xlu0 %374
        %376 = vrot.lane.b32.xlu0 %v373, 121
        %v377 = vpop.permute.xlu0 %376
        %vm378 = vcmask 990208
        %v379 = vsel %vm378, %v375, %v377
        %v381 = vmul.f32 %v370, %v379
        %v382 = vadd.f32 %v360, %v381
        %383 = vset.pattern.permute.xlu0 7
        %384 = vperm.xlu0 %383, %v219
        %v385 = vpop.permute.xlu0 %384
        %v387 = vmul.f32 %v385, %v379
        %v388 = vadd.f32 %v366, %v387
        %v389 = vld [vmem:[#allocation2] sm:$0xff]
        %390 = vset.pattern.permute.xlu0 8
        %391 = vperm.xlu0 %390, %v217
        %v392 = vpop.permute.xlu0 %391
        %v395 = vcombine.high %v389, %v389
        %396 = vrot.lane.b32.xlu0 %v389, 120
        %v397 = vpop.permute.xlu0 %396
        %398 = vrot.lane.b32.xlu0 %v395, 120
        %v399 = vpop.permute.xlu0 %398
        %vm400 = vcmask 982016
        %v401 = vsel %vm400, %v397, %v399
        %v403 = vmul.f32 %v392, %v401
        %v404 = vadd.f32 %v382, %v403
        %405 = vset.pattern.permute.xlu0 8
        %406 = vperm.xlu0 %405, %v219
        %v407 = vpop.permute.xlu0 %406
        %v409 = vmul.f32 %v407, %v401
        %v410 = vadd.f32 %v388, %v409
        %v411 = vsel %vm201, %v404, 0.0
        %v412 = vrot.slane %v411, 4
        %v413 = vadd.f32 %v411, %v412
        %v414 = vrot.slane %v413, 2
        %v415 = vadd.f32 %v413, %v414
        %v416 = vrot.slane %v415, 1
        %v417 = vadd.f32 %v415, %v416
        %v418 = vsel %vm201, %v410, 0.0
        %v419 = vrot.slane %v418, 4
        %v420 = vadd.f32 %v418, %v419
        %v421 = vrot.slane %v420, 2
        %v422 = vadd.f32 %v420, %v421
        %v423 = vrot.slane %v422, 1
        %v424 = vadd.f32 %v422, %v423
        %vm425 = vcmask 1040384
        %v426 = vsel %vm425, %v417, %v424
        %v427 = vld [vmem:[%s2] sm:$0x3]
        %429 = vset.pattern.permute.xlu0 0
        %430 = vperm.xlu0 %429, %v427
        %v431 = vpop.permute.xlu0 %430
        %v433 = vadd.f32 %v426, %v431
        %434 = vst [vmem:[%s200] sm:$0x3] %v433
        %s435 = sand.u32 %s97, 1
        %s436 = scalar_lea.sflag [#allocation5], %s435
        %s437 = sand.u32 %s97, 1
        %s438 = smul.addr %s437, 2
        %s439 = scalar_lea.vmem [#allocation8], %s438
        // Predicated region
        $region41: #{tpu_custom_call.1} parent=31 // pred_check
          %p440 = pneg %p107
        $region42: #{tpu_custom_call.1} parent=31 // pred_check_branch
          %442 = sbr.rel (%p440) target = $region44
        $region43: #{tpu_custom_call.1} parent=31 // pred_region
          %s444 = ssub.s32 32, 32
          %445 = vsyncadd %s436, %s444
          %s446 = smul.addr %s21, 32
          %s447 = scalar_lea.hbm %s3, %s446
          %s449 = sshll.u32 %s439, 4
          %s450 = int_to_ptr.vmem [resolvable:$true] %s449
          %452 = dma.vmem_to_hbm [thread:$0]  %s450, 32, %s447, %s436
        $region44: #{tpu_custom_call.1} parent=31 // pred_fallthru
          _
      $region32: #{tpu_custom_call.1} parent=5 // pred_fallthru
        _
      %p453 = scmp.le.s32.totalorder 2, %s16
      // Predicated region
      $region45: #{tpu_custom_call.1} parent=5 // pred_check
        %p454 = pneg %p453
      $region46: #{tpu_custom_call.1} parent=5 // pred_check_branch
        %456 = sbr.rel (%p454) target = $region48
      $region47: #{tpu_custom_call.1} parent=5 // pred_region
        %s457 = ssub.s32 %s16, 2
        // Predicated region
        $region49: #{tpu_custom_call.1} parent=47 // pred_check
          %p458 = pneg %p113
        $region50: #{tpu_custom_call.1} parent=47 // pred_check_branch
          %460 = sbr.rel (%p458) target = $region52
        $region51: #{tpu_custom_call.1} parent=47 // pred_region
          %s461 = sand.u32 %s98, 1
          %s462 = scalar_lea.sflag [#allocation5], %s461
          %s463 = sand.u32 %s98, 1
          %s464 = smul.addr %s463, 2
          %s465 = scalar_lea.vmem [#allocation8], %s464
          %466 = dma.done %s462, 32
        $region52: #{tpu_custom_call.1} parent=47 // pred_fallthru
          _
      $region48: #{tpu_custom_call.1} parent=5 // pred_fallthru
        _
    $region6: #{tpu_custom_call.1} parent=1 // loop_footer
      %s20 = sadd.s32 1, %s16
    $region7: #{tpu_custom_call.1} parent=1 // loop_footer_branch
      %15 = sbr.rel target = $region3
    $region8: #{tpu_custom_call.1} parent=1 // loop_exit
      _
    %467 = vsyncpa [#allocation4], 1
    %s468 = scalar_lea.sflag [#allocation4], 1
    %469 = vsyncpa %s468, 1
    %470 = vsyncpa [#allocation7], 1
    %471 = vsyncpa [#allocation5], 1
    %s472 = scalar_lea.sflag [#allocation5], 1
    %473 = vsyncpa %s472, 1

</llo_original>
